<compile_context>
chip_gen: v7x
topology: tpu7x:2x2x1
jax: 0.10.0
libtpu: 0.0.40
codegen_flags: <defaults>
</compile_context>

<pallas_src>
import math

import jax
import jax.numpy as jnp
from jax import lax
from jax.experimental import pallas as pl
from jax.experimental.pallas import tpu as pltpu


# --------------------------------------------------------------------------- #
# Tiling helpers
# --------------------------------------------------------------------------- #
def _round_up(x, m):
    return ((x + m - 1) // m) * m


def _sublane_multiple(dtype):
    # 8 for f32, 16 for bf16, 32 for int8/fp8 (sub-32-bit types pack sublanes).
    return max(8, 32 // jnp.dtype(dtype).itemsize)


def _lane_dense_dim(d):
    """Pad `d` to a multiple of 128 lanes when the byte inflation is <= 25%."""
    padded = _round_up(d, 128)
    if padded == d:
        return d
    if padded * 4 <= d * 5:  # <= 25% extra HBM bytes -> dense stores win
        return padded
    # TODO(synk): sub-128 last dims keep masked (lane-sparse) stores; padding
    # e.g. 8 -> 128 would inflate the attn HBM writeback 16x.
    return d


def _vmem_budget_and_limit():
    """Generation-aware scoped-VMEM limit and tiling budget."""
    try:
        cap = int(pltpu.get_tpu_info().vmem_capacity_bytes)
    except Exception:
        cap = 0
    if cap <= 0:
        cap = 64 * 1024 * 1024  # conservative default: v7x per-TC VMEM
    limit = min((cap * 3) // 4, 96 * 1024 * 1024)  # ~48 MiB v7x, 96 MiB v5e/v6e
    budget = (limit * 4) // 5                       # headroom for compiler scratch
    return budget, limit


def _step_vmem_bytes(bt, tq, sk_pad, dk, dk_pad, in_dtype, ctx_dtype,
                     attn_dtype, with_attn):
    """Per-grid-step VMEM footprint, modelling tiled-layout padding."""

    def blk(rows, cols, dtype):
        sub = _sublane_multiple(dtype)
        return (bt * _round_up(rows, sub) * _round_up(cols, 128)
                * jnp.dtype(dtype).itemsize)

    # Double-buffered pipeline blocks (HBM <-> VMEM).
    pipe = blk(tq, dk, in_dtype)              # Q
    pipe += blk(sk_pad, dk, in_dtype)         # K
    pipe += blk(sk_pad, dk_pad, in_dtype)     # V
    pipe += blk(tq, dk_pad, ctx_dtype)        # ctx out
    if with_attn:
        pipe += blk(tq, sk_pad, attn_dtype)   # attn out
    pipe *= 2

    # f32 in-kernel intermediates (scores / exp / attn live together, plus ctx).
    tmp = 3 * blk(tq, sk_pad, jnp.float32)
    tmp += blk(tq, dk_pad, jnp.float32)
    return pipe + tmp


def _choose_tiles(BH, Sq, sk_pad, dk, dk_pad, in_dtype, ctx_dtype, attn_dtype,
                  with_attn, budget_bytes):
    """Pick (bh_tile, tq). Prefer large tq; shrink bh_tile before shrinking tq."""
    sub = _sublane_multiple(in_dtype)

    # Q-tile candidates: full Sq first, then sublane-aligned divisors (largest
    # first), then plain 8-aligned divisors as a last resort.
    tq_cands = [Sq]
    tq_cands += sorted((d for d in range(sub, Sq, sub) if Sq % d == 0),
                       reverse=True)
    tq_cands += sorted((d for d in range(8, Sq, 8)
                        if Sq % d == 0 and d not in tq_cands), reverse=True)
    bh_cands = sorted((d for d in range(1, BH + 1) if BH % d == 0), reverse=True)

    def fits(bt, tq):
        return _step_vmem_bytes(bt, tq, sk_pad, dk, dk_pad, in_dtype,
                                ctx_dtype, attn_dtype, with_attn) <= budget_bytes

    for tq in tq_cands:
        if not fits(1, tq):
            continue  # shrink bh_tile all the way to 1 before shrinking tq
        for bt in bh_cands:
            if fits(bt, tq):
                # Keep >= 2 head tiles when possible so megacore (v7x) can
                # split the (only "parallel") head axis across its TensorCores.
                if BH // bt == 1 and BH >= 2 and BH % 2 == 0:
                    bt = BH // 2
                return bt, tq
    return 1, min(tq_cands)  # best effort; rely on vmem_limit headroom


# --------------------------------------------------------------------------- #
# Kernel
# --------------------------------------------------------------------------- #
def _make_attn_kernel(scale, num_real_keys, mask_padded_keys, with_attn):
    def kernel(q_ref, k_ref, v_ref, *out_refs):
        ctx_ref = out_refs[0]

        # QK^T in the operands' native dtype on the MXU, f32 accumulation.
        # Contraction on the last axis of both operands -> no K transpose.
        scores = jnp.einsum(
            "bqd,bkd->bqk", q_ref[...], k_ref[...],
            preferred_element_type=jnp.float32,
        ) * scale  # fold 1/sqrt(dk) into the f32 scores (cheapest place)

        if mask_padded_keys:
            # Zero-padded keys (for lane-dense outputs) must not contribute.
            key_idx = lax.broadcasted_iota(jnp.int32, scores.shape, 2)
            scores = jnp.where(key_idx < num_real_keys, scores,
                               jnp.finfo(jnp.float32).min)

        # Numerically stable softmax along keys, kept in f32.
        m = jnp.max(scores, axis=-1, keepdims=True)
        e = jnp.exp(scores - m)
        s = jnp.sum(e, axis=-1, keepdims=True)
        attn = e * pl.reciprocal(s, approx=True)  # EUP vrcp; VALU stays free

        # attn @ V: cast softmax weights to V's dtype so the MXU stays narrow.
        v = v_ref[...]
        ctx = jnp.einsum("bqk,bkd->bqd", attn.astype(v.dtype), v,
                         preferred_element_type=jnp.float32)

        ctx_ref[...] = ctx.astype(ctx_ref.dtype)
        if with_attn:
            out_refs[1][...] = attn.astype(out_refs[1].dtype)

    return kernel


# --------------------------------------------------------------------------- #
# Wrapper
# --------------------------------------------------------------------------- #
def prompt_attention_b(Q, K, V, mask=None, *, return_attn=True, attn_dtype=None):
    """Pallas equivalent of Promptattention_b.forward. Returns (context, attn)."""
    B, H, Sq, dk = Q.shape
    Sk = K.shape[2]
    # The reference forward never applies `mask`; kept for API parity only.
    # TODO(synk): an additive/causal mask would be added to `scores` pre-softmax.
    del mask

    BH = B * H
    q = Q.reshape(BH, Sq, dk)
    k = K.reshape(BH, Sk, dk)
    v = V.reshape(BH, Sk, dk)

    ctx_dtype = Q.dtype
    attn_out_dtype = attn_dtype if attn_dtype is not None else Q.dtype

    # Lane-dense output padding (key axis for attn, feature axis for ctx).
    Sk_out = _lane_dense_dim(Sk)
    dk_out = _lane_dense_dim(dk)
    if Sk_out != Sk:
        k = jnp.pad(k, ((0, 0), (0, Sk_out - Sk), (0, 0)))
        v = jnp.pad(v, ((0, 0), (0, Sk_out - Sk), (0, 0)))
    if dk_out != dk:
        v = jnp.pad(v, ((0, 0), (0, 0), (0, dk_out - dk)))

    budget, vmem_limit = _vmem_budget_and_limit()
    bh_tile, tq = _choose_tiles(BH, Sq, Sk_out, dk, dk_out, Q.dtype, ctx_dtype,
                                attn_out_dtype, return_attn, budget)
    grid = (BH // bh_tile, Sq // tq)

    kernel = _make_attn_kernel(
        scale=1.0 / math.sqrt(dk),
        num_real_keys=Sk,
        mask_padded_keys=(Sk_out != Sk),
        with_attn=return_attn,
    )

    out_shapes = [jax.ShapeDtypeStruct((BH, Sq, dk_out), ctx_dtype)]
    out_specs = [pl.BlockSpec((bh_tile, tq, dk_out), lambda b, qi: (b, qi, 0))]
    if return_attn:
        out_shapes.append(jax.ShapeDtypeStruct((BH, Sq, Sk_out), attn_out_dtype))
        out_specs.append(
            pl.BlockSpec((bh_tile, tq, Sk_out), lambda b, qi: (b, qi, 0)))

    outs = pl.pallas_call(
        kernel,
        out_shape=tuple(out_shapes),
        grid_spec=pltpu.PrefetchScalarGridSpec(
            num_scalar_prefetch=0,
            grid=grid,
            in_specs=[
                pl.BlockSpec((bh_tile, tq, dk), lambda b, qi: (b, qi, 0)),
                pl.BlockSpec((bh_tile, Sk_out, dk), lambda b, qi: (b, 0, 0)),
                pl.BlockSpec((bh_tile, Sk_out, dk_out), lambda b, qi: (b, 0, 0)),
            ],
            out_specs=tuple(out_specs),
        ),
        compiler_params=pltpu.CompilerParams(
            # K/V block indices are constant over qi: shard only the head axis
            # across megacore TCs so K/V are never re-fetched per core per head.
            dimension_semantics=("parallel", "arbitrary"),
            vmem_limit_bytes=vmem_limit,
        ),
    )(q, k, v)

    ctx = outs[0]
    if dk_out != dk:
        ctx = ctx[..., :dk]
    ctx = ctx.reshape(B, H, Sq, dk)
    if not return_attn:
        return ctx

    attn = outs[1]
    if Sk_out != Sk:
        attn = attn[..., :Sk]
    attn = attn.reshape(B, H, Sq, Sk)
    return ctx, attn


# --------------------------------------------------------------------------- #
# Reference + self-test
# --------------------------------------------------------------------------- #
def _reference(Q, K, V, dk):
    scores = jnp.einsum("bhqd,bhkd->bhqk", Q.astype(jnp.float32),
                        K.astype(jnp.float32)) / jnp.sqrt(jnp.float32(dk))
    attn = jax.nn.softmax(scores, axis=-1)
    ctx = jnp.einsum("bhqk,bhkd->bhqd", attn, V.astype(jnp.float32))
    return ctx, attn


def _run_case(key, B, H, Sq, Sk, dk):
    kq, kk, kv = jax.random.split(key, 3)
    Q = jax.random.normal(kq, (B, H, Sq, dk), dtype=jnp.float32)
    K = jax.random.normal(kk, (B, H, Sk, dk), dtype=jnp.float32)
    V = jax.random.normal(kv, (B, H, Sk, dk), dtype=jnp.float32)
    mask = jnp.zeros((B, H, Sq, Sk), dtype=jnp.float32)  # unused, API parity

    ctx, attn = prompt_attention_b(Q, K, V, mask)
    jax.block_until_ready((ctx, attn))

    ctx_ref, attn_ref = _reference(Q, K, V, dk)
    assert ctx.shape == (B, H, Sq, dk) and attn.shape == (B, H, Sq, Sk)
    # Tolerance accommodates the EUP approximate reciprocal in the softmax.
    assert jnp.allclose(ctx, ctx_ref, atol=5e-3, rtol=5e-3), "context mismatch"
    assert jnp.allclose(attn, attn_ref, atol=5e-3, rtol=5e-3), "attn mismatch"


if __name__ == "__main__":
    root = jax.random.PRNGKey(0)
    k1, k2 = jax.random.split(root)
    # Small shape matching the module's intent (Sk, dk < 128: no output padding).
    _run_case(k1, B=2, H=2, Sq=8, Sk=8, dk=32)
    # Lane-dense path: Sk = 224 is padded to 256 (zero-padded K/V + masked keys).
    _run_case(k2, B=1, H=2, Sq=16, Sk=224, dk=32)
    print("KERNEL_OK")
</pallas_src>

<mosaic_0001>
module attributes {stable_mosaic.version = 11 : i64} {
  func.func @kernel(%arg0: i32, %arg1: i32, %arg2: memref<2x8x32xf32, #tpu.memory_space<vmem>>, %arg3: memref<2x8x32xf32, #tpu.memory_space<vmem>>, %arg4: memref<2x8x32xf32, #tpu.memory_space<vmem>>, %arg5: memref<2x8x32xf32, #tpu.memory_space<vmem>>, %arg6: memref<2x8x8xf32, #tpu.memory_space<vmem>>) attributes {dimension_semantics = [#tpu.dimension_semantics<parallel>, #tpu.dimension_semantics<arbitrary>], iteration_bounds = array<i64: 2, 1>, scalar_prefetch = 0 : i64, scratch_operands = 0 : i64, tpu.core_type = #tpu.core_type<tc>, window_params = [{transform_indices = @transform_0, window_bounds = array<i64: 2, 8, 32>}, {transform_indices = @transform_1, window_bounds = array<i64: 2, 8, 32>}, {transform_indices = @transform_2, window_bounds = array<i64: 2, 8, 32>}, {transform_indices = @transform_3, window_bounds = array<i64: 2, 8, 32>}, {transform_indices = @transform_4, window_bounds = array<i64: 2, 8, 8>}]} {
    %c0 = arith.constant 0 : index
    %c0_0 = arith.constant 0 : index
    %c0_1 = arith.constant 0 : index
    %0 = vector.load %arg2[%c0, %c0_0, %c0_1] : memref<2x8x32xf32, #tpu.memory_space<vmem>>, vector<2x8x32xf32>
    %c0_2 = arith.constant 0 : index
    %c0_3 = arith.constant 0 : index
    %c0_4 = arith.constant 0 : index
    %1 = vector.load %arg3[%c0_2, %c0_3, %c0_4] : memref<2x8x32xf32, #tpu.memory_space<vmem>>, vector<2x8x32xf32>
    "tpu.trace_start"() <{level = 10 : i32, message = "bqd,bkd->bqk"}> : () -> ()
    %cst = arith.constant dense<0.000000e+00> : vector<2x8x8xf32>
    %2 = tpu.matmul %0, %1, %cst {dimension_numbers = #tpu.dot_dimension_numbers<[2], [2], [1], [1], [0, 0, 0, 1, 1, 1], [0], [0]>} : vector<2x8x32xf32>, vector<2x8x32xf32>, vector<2x8x8xf32> -> vector<2x8x8xf32>
    "tpu.trace_stop"() : () -> ()
    %cst_5 = arith.constant 0.176776692 : f32
    %3 = vector.broadcast %cst_5 : f32 to vector<2x8x8xf32>
    %4 = arith.mulf %2, %3 : vector<2x8x8xf32>
    %cst_6 = arith.constant dense<0xFF800000> : vector<2x8xf32>
    %5 = vector.multi_reduction <maximumf>, %4, %cst_6 [2] : vector<2x8x8xf32> to vector<2x8xf32>
    %6 = vector.shape_cast %5 : vector<2x8xf32> to vector<2x8x1xf32>
    %7 = vector.broadcast %6 : vector<2x8x1xf32> to vector<2x8x8xf32>
    %8 = arith.subf %4, %7 : vector<2x8x8xf32>
    %9 = math.exp %8 : vector<2x8x8xf32>
    %cst_7 = arith.constant dense<0.000000e+00> : vector<2x8xf32>
    %10 = vector.multi_reduction <add>, %9, %cst_7 [2] : vector<2x8x8xf32> to vector<2x8xf32>
    %11 = vector.shape_cast %10 : vector<2x8xf32> to vector<2x8x1xf32>
    %12 = tpu.reciprocal %11 {approx = true} : vector<2x8x1xf32> -> vector<2x8x1xf32>
    %13 = vector.broadcast %12 : vector<2x8x1xf32> to vector<2x8x8xf32>
    %14 = arith.mulf %9, %13 : vector<2x8x8xf32>
    %c0_8 = arith.constant 0 : index
    %c0_9 = arith.constant 0 : index
    %c0_10 = arith.constant 0 : index
    %15 = vector.load %arg4[%c0_8, %c0_9, %c0_10] : memref<2x8x32xf32, #tpu.memory_space<vmem>>, vector<2x8x32xf32>
    "tpu.trace_start"() <{level = 10 : i32, message = "bqk,bkd->bqd"}> : () -> ()
    %cst_11 = arith.constant dense<0.000000e+00> : vector<2x8x32xf32>
    %16 = tpu.matmul %14, %15, %cst_11 {dimension_numbers = #tpu.dot_dimension_numbers<[2], [1], [1], [2], [0, 0, 0, 1, 1, 2], [0], [0]>} : vector<2x8x8xf32>, vector<2x8x32xf32>, vector<2x8x32xf32> -> vector<2x8x32xf32>
    "tpu.trace_stop"() : () -> ()
    %c0_12 = arith.constant 0 : index
    %c0_13 = arith.constant 0 : index
    %c0_14 = arith.constant 0 : index
    %17 = vector.load %arg5[%c0_12, %c0_13, %c0_14] : memref<2x8x32xf32, #tpu.memory_space<vmem>>, vector<2x8x32xf32>
    tpu.vector_store %arg5[%c0_12, %c0_13, %c0_14], %16 {strides = array<i32>} : memref<2x8x32xf32, #tpu.memory_space<vmem>>, vector<2x8x32xf32>,
    %c0_15 = arith.constant 0 : index
    %c0_16 = arith.constant 0 : index
    %c0_17 = arith.constant 0 : index
    %18 = vector.load %arg6[%c0_15, %c0_16, %c0_17] : memref<2x8x8xf32, #tpu.memory_space<vmem>>, vector<2x8x8xf32>
    tpu.vector_store %arg6[%c0_15, %c0_16, %c0_17], %14 {strides = array<i32>} : memref<2x8x8xf32, #tpu.memory_space<vmem>>, vector<2x8x8xf32>,
    return
  }
  func.func @transform_0(%arg0: i32, %arg1: i32) -> (i32, i32, i32) {
    %c0_i32 = arith.constant 0 : i32
    %c0_i32_0 = arith.constant 0 : i32
    return %arg0, %arg1, %c0_i32 : i32, i32, i32
  }
  func.func @transform_1(%arg0: i32, %arg1: i32) -> (i32, i32, i32) {
    %c0_i32 = arith.constant 0 : i32
    %c0_i32_0 = arith.constant 0 : i32
    %c0_i32_1 = arith.constant 0 : i32
    return %arg0, %c0_i32, %c0_i32_0 : i32, i32, i32
  }
  func.func @transform_2(%arg0: i32, %arg1: i32) -> (i32, i32, i32) {
    %c0_i32 = arith.constant 0 : i32
    %c0_i32_0 = arith.constant 0 : i32
    %c0_i32_1 = arith.constant 0 : i32
    return %arg0, %c0_i32, %c0_i32_0 : i32, i32, i32
  }
  func.func @transform_3(%arg0: i32, %arg1: i32) -> (i32, i32, i32) {
    %c0_i32 = arith.constant 0 : i32
    %c0_i32_0 = arith.constant 0 : i32
    return %arg0, %arg1, %c0_i32 : i32, i32, i32
  }
  func.func @transform_4(%arg0: i32, %arg1: i32) -> (i32, i32, i32) {
    %c0_i32 = arith.constant 0 : i32
    %c0_i32_0 = arith.constant 0 : i32
    return %arg0, %arg1, %c0_i32 : i32, i32, i32
  }
}

</mosaic_0001>

<llo_original>
// kernel: tpu_custom_call.1
$region0: #{tpu_custom_call.1}
  #allocation0 [shape = 'u32[]', space=smem, size = 0x4, offset = 0x4, fixed_abs, tag = 'smem constant byte address 0x4 - core index']
  #allocation1 [shape = 'u32[144,128]{1,0:T(1,128)}', space=vmem, size = 0x12000, scoped, tag = 'internal scratch']
  %s0 = inlined_call_operand.hbm [shape: f32[4,8,32], index: 0, kind: input, shape index: {}]
  %s1 = inlined_call_operand.hbm [shape: f32[4,8,32], index: 1, kind: input, shape index: {}]
  %s2 = inlined_call_operand.hbm [shape: f32[4,8,32], index: 2, kind: input, shape index: {}]
  %s3 = inlined_call_operand.hbm [shape: f32[4,8,32], index: 3, kind: output, shape index: {0}]
  %s4 = inlined_call_operand.hbm [shape: f32[4,8,8], index: 4, kind: output, shape index: {1}]
  %5 = xla_tuple %s3, %s4
  %s6 = sld [smem:[#allocation0]]
  $region65: #{tpu_custom_call.1} parent=0
    _
  %s8 = ssub.s32 1, %s6
  %s9 = scalar_select 0, %s8, %s6
  $region1: #{tpu_custom_call.1} parent=0
    #allocation2 [shape = 'u8[16384]{0}', space=vmem, size = 0x4000, scoped, tag = 'input window, operand 0']
    #allocation3 [shape = 's32[2]{0}', space=sflag, size = 0x8, scoped, tag = 'scoped memory for tpu_custom_call.1']
    #allocation4 [shape = 's32[2]{0}', space=sflag, size = 0x8, scoped, tag = 'scoped memory for tpu_custom_call.1']
    #allocation5 [shape = 'u8[16384]{0}', space=vmem, size = 0x4000, scoped, tag = 'input window, operand 1']
    #allocation6 [shape = 's32[2]{0}', space=sflag, size = 0x8, scoped, tag = 'scoped memory for tpu_custom_call.1']
    #allocation7 [shape = 'u8[16384]{0}', space=vmem, size = 0x4000, scoped, tag = 'input window, operand 2']
    #allocation8 [shape = 'u8[16384]{0}', space=vmem, size = 0x4000, scoped, tag = 'output window, operand 0']
    #allocation9 [shape = 'u8[16384]{0}', space=vmem, size = 0x4000, scoped, tag = 'output window, operand 1']
    #allocation10 [shape = 's32[2]{0}', space=sflag, size = 0x8, scoped, tag = 'scoped memory for tpu_custom_call.1']
    %10 = vsyncpa [#allocation3], 0
    %s11 = scalar_lea.sflag [#allocation3], 1
    %12 = vsyncpa %s11, 0
    %13 = vsyncpa [#allocation6], 0
    %s14 = scalar_lea.sflag [#allocation6], 1
    %15 = vsyncpa %s14, 0
    %16 = vsyncpa [#allocation4], 0
    %s17 = scalar_lea.sflag [#allocation4], 1
    %18 = vsyncpa %s17, 0
    %19 = vsyncpa [#allocation10], 0
    %s20 = scalar_lea.sflag [#allocation10], 1
    %21 = vsyncpa %s20, 0
    loop: start=0, step=1, limit=4
    $region2: #{tpu_custom_call.1} parent=1 // loop_pre_header
      _
    $region3: #{tpu_custom_call.1} parent=1 // loop_header
      %s23 = sphi 0, %s27
      %p24 = scmp.ge.s32.totalorder %s23, 4
      %s30 = sphi 0, %s42
      %s31 = sphi 0, %s38
      %s32 = sphi 0, %s30
      %s33 = sphi 0, %s31
      %s34 = sphi 0, %s32
      %s35 = sphi 0, %s33
      %s47 = sphi 0, %s49
      %s50 = sphi 0, %s47
      %s51 = sphi 0, %s50
      %s67 = sphi 0, %s51
      %s73 = sphi 0, %s75
      %s76 = sphi 0, %s73
      %s77 = sphi 0, %s76
      %s93 = sphi 0, %s77
      %s99 = sphi 0, %s101
      %s102 = sphi 0, %s99
      %s103 = sphi 0, %s102
      %s119 = sphi 0, %s103
      %s127 = sphi 0, %s129
      %s130 = sphi 0, %s127
      %s131 = sphi 0, %s130
      %s147 = sphi 0, %s131
      %s155 = sphi 0, %s157
      %s158 = sphi 0, %s155
      %s159 = sphi 0, %s158
      %s175 = sphi 0, %s159
    $region4: #{tpu_custom_call.1} parent=1 // loop_header_branch
      %26 = sbr.rel (%p24) target = $region8
    $region5: #{tpu_custom_call.1} parent=1 // loop_body
      %s28 = ssub.s32 %s23, 1
      %s29 = ssub.s32 %s23, 2
      %s36 = sadd.s32 1, %s31
      %p37 = scmp.ge.s32.totalorder %s36, 1
      %s38 = scalar_select %p37, 0, %s36
      %s39 = sadd.s32 1, %s30
      %s40 = scalar_select %p37, %s39, %s30
      %p41 = scmp.ge.s32.totalorder %s40, 2
      %s42 = scalar_select %p41, 0, %s40
      %s43 = ssub.s32 %s30, %s42
      %s44 = ssub.s32 %s31, %s38
      %s45 = sor.u32 %s43, %s44
      %p46 = scmp.eq.s32.totalorder %s45, 0
      %s48 = sadd.s32 %s47, 1
      %s49 = scalar_select %p46, %s47, %s48
      %p52 = pneg %p46
      %p53 = scmp.eq.s32.totalorder %s23, 1
      %p54 = por %p52, %p53
      %p55 = scmp.ne.s32.totalorder %s47, %s50
      %p56 = scmp.eq.s32.totalorder %s23, 0
      %p57 = por %p55, %p56
      %p58 = scmp.ne.s32.totalorder %s47, %s50
      %p59 = scmp.eq.s32.totalorder %s28, 1
      %p60 = por %p58, %p59
      %p61 = scmp.ne.s32.totalorder %s50, %s51
      %p62 = scmp.eq.s32.totalorder %s28, 0
      %p63 = por %p61, %p62
      %p64 = scmp.ne.s32.totalorder %s50, %s51
      %p65 = scmp.eq.s32.totalorder %s29, 1
      %p66 = por %p64, %p65
      %p68 = scmp.ne.s32.totalorder %s51, %s67
      %p69 = scmp.eq.s32.totalorder %s29, 0
      %p70 = por %p68, %p69
      %s71 = ssub.s32 %s30, %s42
      %p72 = scmp.eq.s32.totalorder %s71, 0
      %s74 = sadd.s32 %s73, 1
      %s75 = scalar_select %p72, %s73, %s74
      %p78 = pneg %p72
      %p79 = scmp.eq.s32.totalorder %s23, 1
      %p80 = por %p78, %p79
      %p81 = scmp.ne.s32.totalorder %s73, %s76
      %p82 = scmp.eq.s32.totalorder %s23, 0
      %p83 = por %p81, %p82
      %p84 = scmp.ne.s32.totalorder %s73, %s76
      %p85 = scmp.eq.s32.totalorder %s28, 1
      %p86 = por %p84, %p85
      %p87 = scmp.ne.s32.totalorder %s76, %s77
      %p88 = scmp.eq.s32.totalorder %s28, 0
      %p89 = por %p87, %p88
      %p90 = scmp.ne.s32.totalorder %s76, %s77
      %p91 = scmp.eq.s32.totalorder %s29, 1
      %p92 = por %p90, %p91
      %p94 = scmp.ne.s32.totalorder %s77, %s93
      %p95 = scmp.eq.s32.totalorder %s29, 0
      %p96 = por %p94, %p95
      %s97 = ssub.s32 %s30, %s42
      %p98 = scmp.eq.s32.totalorder %s97, 0
      %s100 = sadd.s32 %s99, 1
      %s101 = scalar_select %p98, %s99, %s100
      %p104 = pneg %p98
      %p105 = scmp.eq.s32.totalorder %s23, 1
      %p106 = por %p104, %p105
      %p107 = scmp.ne.s32.totalorder %s99, %s102
      %p108 = scmp.eq.s32.totalorder %s23, 0
      %p109 = por %p107, %p108
      %p110 = scmp.ne.s32.totalorder %s99, %s102
      %p111 = scmp.eq.s32.totalorder %s28, 1
      %p112 = por %p110, %p111
      %p113 = scmp.ne.s32.totalorder %s102, %s103
      %p114 = scmp.eq.s32.totalorder %s28, 0
      %p115 = por %p113, %p114
      %p116 = scmp.ne.s32.totalorder %s102, %s103
      %p117 = scmp.eq.s32.totalorder %s29, 1
      %p118 = por %p116, %p117
      %p120 = scmp.ne.s32.totalorder %s103, %s119
      %p121 = scmp.eq.s32.totalorder %s29, 0
      %p122 = por %p120, %p121
      %s123 = ssub.s32 %s30, %s42
      %s124 = ssub.s32 %s31, %s38
      %s125 = sor.u32 %s123, %s124
      %p126 = scmp.eq.s32.totalorder %s125, 0
      %s128 = sadd.s32 %s127, 1
      %s129 = scalar_select %p126, %s127, %s128
      %p132 = pneg %p126
      %p133 = scmp.eq.s32.totalorder %s23, 1
      %p134 = por %p132, %p133
      %p135 = scmp.ne.s32.totalorder %s127, %s130
      %p136 = scmp.eq.s32.totalorder %s23, 0
      %p137 = por %p135, %p136
      %p138 = scmp.ne.s32.totalorder %s127, %s130
      %p139 = scmp.eq.s32.totalorder %s28, 1
      %p140 = por %p138, %p139
      %p141 = scmp.ne.s32.totalorder %s130, %s131
      %p142 = scmp.eq.s32.totalorder %s28, 0
      %p143 = por %p141, %p142
      %p144 = scmp.ne.s32.totalorder %s130, %s131
      %p145 = scmp.eq.s32.totalorder %s29, 1
      %p146 = por %p144, %p145
      %p148 = scmp.ne.s32.totalorder %s131, %s147
      %p149 = scmp.eq.s32.totalorder %s29, 0
      %p150 = por %p148, %p149
      %s151 = ssub.s32 %s30, %s42
      %s152 = ssub.s32 %s31, %s38
      %s153 = sor.u32 %s151, %s152
      %p154 = scmp.eq.s32.totalorder %s153, 0
      %s156 = sadd.s32 %s155, 1
      %s157 = scalar_select %p154, %s155, %s156
      %p160 = pneg %p154
      %p161 = scmp.eq.s32.totalorder %s23, 1
      %p162 = por %p160, %p161
      %p163 = scmp.ne.s32.totalorder %s155, %s158
      %p164 = scmp.eq.s32.totalorder %s23, 0
      %p165 = por %p163, %p164
      %p166 = scmp.ne.s32.totalorder %s155, %s158
      %p167 = scmp.eq.s32.totalorder %s28, 1
      %p168 = por %p166, %p167
      %p169 = scmp.ne.s32.totalorder %s158, %s159
      %p170 = scmp.eq.s32.totalorder %s28, 0
      %p171 = por %p169, %p170
      %p172 = scmp.ne.s32.totalorder %s158, %s159
      %p173 = scmp.eq.s32.totalorder %s29, 1
      %p174 = por %p172, %p173
      %p176 = scmp.ne.s32.totalorder %s159, %s175
      %p177 = scmp.eq.s32.totalorder %s29, 0
      %p178 = por %p176, %p177
      %p179 = scmp.le.s32.totalorder 1, %s23
      %p180 = scmp.lt.s32.totalorder %s23, 3
      %p181 = pnand %p179, %p180
      %p182 = pneg %p181
      // Predicated region
      $region9: #{tpu_custom_call.1} parent=5 // pred_check
        _
      $region10: #{tpu_custom_call.1} parent=5 // pred_check_branch
        %184 = sbr.rel (%p181) target = $region12
      $region11: #{tpu_custom_call.1} parent=5 // pred_region
        %s185 = ssub.s32 %s23, 1
      $region12: #{tpu_custom_call.1} parent=5 // pred_fallthru
        _
      %p186 = scmp.lt.s32.totalorder %s23, 2
      // Predicated region
      $region13: #{tpu_custom_call.1} parent=5 // pred_check
        %p187 = pneg %p186
      $region14: #{tpu_custom_call.1} parent=5 // pred_check_branch
        %189 = sbr.rel (%p187) target = $region16
      $region15: #{tpu_custom_call.1} parent=5 // pred_region
        // Predicated region
        $region17: #{tpu_custom_call.1} parent=15 // pred_check
          %p190 = pneg %p57
        $region18: #{tpu_custom_call.1} parent=15 // pred_check_branch
          %192 = sbr.rel (%p190) target = $region20
        $region19: #{tpu_custom_call.1} parent=15 // pred_region
          %s193 = sand.u32 %s47, 1
          %s194 = scalar_lea.sflag [#allocation3], %s193
          %s195 = sand.u32 %s47, 1
          %s196 = smul.addr %s195, 16
          %s197 = scalar_lea.vmem [#allocation2], %s196
          %s198 = smul.u32 2, %s30
          %s200 = ssub.s32 256, 256
          %201 = vsyncadd %s194, %s200
          %s202 = sadd.s32 %s31, %s198
          %s203 = smul.addr %s202, 128
          %s204 = scalar_lea.hbm %s0, %s203
          %s205 = sshll.u32 %s197, 4
          %s206 = int_to_ptr.vmem [resolvable:$true] %s205
          %211 = dma.hbm_to_vmem [thread:$0]  %s204, 256, %s206, %s194, 128, 128, 8
        $region20: #{tpu_custom_call.1} parent=15 // pred_fallthru
          _
        // Predicated region
        $region21: #{tpu_custom_call.1} parent=15 // pred_check
          %p212 = pneg %p83
        $region22: #{tpu_custom_call.1} parent=15 // pred_check_branch
          %214 = sbr.rel (%p212) target = $region24
        $region23: #{tpu_custom_call.1} parent=15 // pred_region
          %s215 = sand.u32 %s23, 1
          %s216 = scalar_lea.sflag [#allocation6], %s215
          %s217 = sand.u32 %s73, 1
          %s218 = smul.addr %s217, 16
          %s219 = scalar_lea.vmem [#allocation5], %s218
          %s220 = smul.u32 2, %s30
          %s222 = ssub.s32 256, 256
          %223 = vsyncadd %s216, %s222
          %s224 = smul.addr %s220, 128
          %s225 = scalar_lea.hbm %s1, %s224
          %s226 = sshll.u32 %s219, 4
          %s227 = int_to_ptr.vmem [resolvable:$true] %s226
          %232 = dma.hbm_to_vmem [thread:$0]  %s225, 256, %s227, %s216, 128, 128, 8
        $region24: #{tpu_custom_call.1} parent=15 // pred_fallthru
          _
        // Predicated region
        $region25: #{tpu_custom_call.1} parent=15 // pred_check
          %p233 = pneg %p109
        $region26: #{tpu_custom_call.1} parent=15 // pred_check_branch
          %235 = sbr.rel (%p233) target = $region28
        $region27: #{tpu_custom_call.1} parent=15 // pred_region
          %s236 = sand.u32 %s23, 1
          %s237 = scalar_lea.sflag [#allocation6], %s236
          %s238 = sand.u32 %s99, 1
          %s239 = smul.addr %s238, 16
          %s240 = scalar_lea.vmem [#allocation7], %s239
          %s241 = smul.u32 2, %s30
          %s243 = ssub.s32 256, 256
          %244 = vsyncadd %s237, %s243
          %s245 = smul.addr %s241, 128
          %s246 = scalar_lea.hbm %s2, %s245
          %s247 = sshll.u32 %s240, 4
          %s248 = int_to_ptr.vmem [resolvable:$true] %s247
          %253 = dma.hbm_to_vmem [thread:$0]  %s246, 256, %s248, %s237, 128, 128, 8
        $region28: #{tpu_custom_call.1} parent=15 // pred_fallthru
          _
      $region16: #{tpu_custom_call.1} parent=5 // pred_fallthru
        _
      %p254 = scmp.le.s32.totalorder 1, %s23
      %p255 = scmp.lt.s32.totalorder %s23, 3
      %p256 = pnand %p254, %p255
      %p257 = pneg %p256
      // Predicated region
      $region29: #{tpu_custom_call.1} parent=5 // pred_check
        _
      $region30: #{tpu_custom_call.1} parent=5 // pred_check_branch
        %259 = sbr.rel (%p256) target = $region32
      $region31: #{tpu_custom_call.1} parent=5 // pred_region
        %s260 = ssub.s32 %s23, 1
        %s261 = sand.u32 %s50, 1
        %s262 = scalar_lea.sflag [#allocation3], %s261
        %s263 = sand.u32 %s50, 1
        %s264 = smul.addr %s263, 16
        %s265 = scalar_lea.vmem [#allocation2], %s264
        // Predicated region
        $region33: #{tpu_custom_call.1} parent=31 // pred_check
          %p266 = pneg %p63
        $region34: #{tpu_custom_call.1} parent=31 // pred_check_branch
          %268 = sbr.rel (%p266) target = $region36
        $region35: #{tpu_custom_call.1} parent=31 // pred_region
          %269 = dma.done %s262, 256
        $region36: #{tpu_custom_call.1} parent=31 // pred_fallthru
          _
        %s270 = sand.u32 %s28, 1
        %s271 = scalar_lea.sflag [#allocation6], %s270
        %s272 = sand.u32 %s76, 1
        %s273 = smul.addr %s272, 16
        %s274 = scalar_lea.vmem [#allocation5], %s273
        // Predicated region
        $region37: #{tpu_custom_call.1} parent=31 // pred_check
          %p275 = pneg %p89
        $region38: #{tpu_custom_call.1} parent=31 // pred_check_branch
          %277 = sbr.rel (%p275) target = $region40
        $region39: #{tpu_custom_call.1} parent=31 // pred_region
          %278 = dma.done %s271, 256
        $region40: #{tpu_custom_call.1} parent=31 // pred_fallthru
          _
        %s279 = sand.u32 %s28, 1
        %s280 = scalar_lea.sflag [#allocation6], %s279
        %s281 = sand.u32 %s102, 1
        %s282 = smul.addr %s281, 16
        %s283 = scalar_lea.vmem [#allocation7], %s282
        // Predicated region
        $region41: #{tpu_custom_call.1} parent=31 // pred_check
          %p284 = pneg %p115
        $region42: #{tpu_custom_call.1} parent=31 // pred_check_branch
          %286 = sbr.rel (%p284) target = $region44
        $region43: #{tpu_custom_call.1} parent=31 // pred_region
          %287 = dma.done %s280, 256
        $region44: #{tpu_custom_call.1} parent=31 // pred_fallthru
          _
        %s288 = sand.u32 %s50, 1
        %s289 = scalar_lea.sflag [#allocation3], %s288
        %s290 = sand.u32 %s50, 1
        %s291 = smul.addr %s290, 16
        %s292 = scalar_lea.vmem [#allocation2], %s291
        %p293 = pneg %p63
        %p294 = pneg %p60
        %s295 = sand.u32 %s28, 1
        %s296 = scalar_lea.sflag [#allocation6], %s295
        %s297 = sand.u32 %s76, 1
        %s298 = smul.addr %s297, 16
        %s299 = scalar_lea.vmem [#allocation5], %s298
        %p300 = pneg %p89
        %p301 = pneg %p86
        %s302 = sand.u32 %s28, 1
        %s303 = scalar_lea.sflag [#allocation6], %s302
        %s304 = sand.u32 %s102, 1
        %s305 = smul.addr %s304, 16
        %s306 = scalar_lea.vmem [#allocation7], %s305
        %p307 = pneg %p115
        %p308 = pneg %p112
        %p309 = pneg %p143
        %p310 = pneg %p140
        %s311 = sand.u32 %s130, 1
        %s312 = scalar_lea.sflag [#allocation4], %s311
        %s313 = sand.u32 %s130, 1
        %s314 = smul.addr %s313, 16
        %s315 = scalar_lea.vmem [#allocation8], %s314
        %p316 = pneg %p171
        %p317 = pneg %p168
        %s318 = sand.u32 %s158, 1
        %s319 = scalar_lea.sflag [#allocation10], %s318
        %s320 = sand.u32 %s158, 1
        %s321 = smul.addr %s320, 16
        %s322 = scalar_lea.vmem [#allocation9], %s321
        %s323 = smul.u32 2, %s32
        %s324 = smul.u32 2, %s32
        %s325 = smul.u32 2, %s32
        %s326 = smul.u32 2, %s32
        %s327 = smul.u32 2, %s32
        %v328 = vld [vmem:[%s265] sm:$0xff]
        %v329 = vld [vmem:[%s265 + $0x8] sm:$0xff]
        %v330 = vld [vmem:[%s274] sm:$0xff]
        %v331 = vld [vmem:[%s274 + $0x8] sm:$0xff]
        %vm332 = vcmask 261120
        %v334 = vsel %vm332, %v328, 0
        %v337 = vsel %vm332, %v330, 0
        %339 = vmatprep.subr.mxu0 0.0
        %340 = vmatpush1.xpose.msra.mxu0 %v337
        %341 = vmatprep.subr.mxu0 0.0
        %342 = vmatpush1.xpose.msra.mxu0 0.0
        %343 = vmatprep.subr.mxu0 0.0
        %344 = vmatpush1.xpose.msra.mxu0 0.0
        %345 = vmatprep.subr.mxu0 0.0
        %346 = vmatpush1.xpose.msra.mxu0 0.0
        %347 = vmatprep.subr.mxu0 0.0
        %348 = vmatpush1.xpose.msra.mxu0 0.0
        %349 = vmatprep.subr.mxu0 0.0
        %350 = vmatpush1.xpose.msra.mxu0 0.0
        %351 = vmatprep.subr.mxu0 0.0
        %352 = vmatpush1.xpose.msra.mxu0 0.0
        %353 = vmatprep.subr.mxu0 0.0
        %354 = vmatpush1.xpose.msra.mxu0 0.0
        %355 = vmatprep.subr.mxu0 0.0
        %356 = vmatpush1.xpose.msra.mxu0 0.0
        %357 = vmatprep.subr.mxu0 0.0
        %358 = vmatpush1.xpose.msra.mxu0 0.0
        %359 = vmatprep.subr.mxu0 0.0
        %360 = vmatpush1.xpose.msra.mxu0 0.0
        %361 = vmatprep.subr.mxu0 0.0
        %362 = vmatpush1.xpose.msra.mxu0 0.0
        %363 = vmatprep.subr.mxu0 0.0
        %364 = vmatpush1.xpose.msra.mxu0 0.0
        %365 = vmatprep.subr.mxu0 0.0
        %366 = vmatpush1.xpose.msra.mxu0 0.0
        %367 = vmatprep.subr.mxu0 0.0
        %368 = vmatpush1.xpose.msra.mxu0 0.0
        %369 = vmatprep.subr.mxu0 0.0
        %370 = vmatpush1.xpose.msra.mxu0 0.0
        %371 = vmatprep.subr.mxu0 0.0
        %372 = vmatpush1.xpose.msra.mxu0 0.0
        %373 = vmatprep.subr.mxu0 0.0
        %374 = vmatpush1.xpose.msra.mxu0 0.0
        %375 = vmatprep.subr.mxu0 0.0
        %376 = vmatpush1.xpose.msra.mxu0 0.0
        %377 = vmatprep.subr.mxu0 0.0
        %378 = vmatpush1.xpose.msra.mxu0 0.0
        %379 = vmatprep.subr.mxu0 0.0
        %380 = vmatpush1.xpose.msra.mxu0 0.0
        %381 = vmatprep.subr.mxu0 0.0
        %382 = vmatpush1.xpose.msra.mxu0 0.0
        %383 = vmatprep.subr.mxu0 0.0
        %384 = vmatpush1.xpose.msra.mxu0 0.0
        %385 = vmatprep.subr.mxu0 0.0
        %386 = vmatpush1.xpose.msra.mxu0 0.0
        %387 = vmatprep.subr.mxu0 0.0
        %388 = vmatpush1.xpose.msra.mxu0 0.0
        %389 = vmatprep.subr.mxu0 0.0
        %390 = vmatpush1.xpose.msra.mxu0 0.0
        %391 = vmatprep.subr.mxu0 0.0
        %392 = vmatpush1.xpose.msra.mxu0 0.0
        %393 = vmatprep.subr.mxu0 0.0
        %394 = vmatpush1.xpose.msra.mxu0 0.0
        %395 = vmatprep.subr.mxu0 0.0
        %396 = vmatpush1.xpose.msra.mxu0 0.0
        %397 = vmatprep.subr.mxu0 0.0
        %398 = vmatpush1.xpose.msra.mxu0 0.0
        %399 = vmatprep.subr.mxu0 0.0
        %400 = vmatpush1.xpose.msra.mxu0 0.0
        %401 = vmatprep.subr.mxu0 0.0
        %402 = vmatpush1.xpose.msra.mxu0 0.0
        %403 = vmatprep.mubr.f32.mxu0 0.0
        %404 = vmatmul.mubr.f32.gmra.mrb[0].mxu0 %v334
        %v405 = vpop.f32.mrb[0].mxu0
        %v406 = vadd.f32 0.0, %v405
        %v407 = vpop.f32.mrb[0].mxu0
        %408 = vdwg.mxu0
        %v410 = vsel %vm332, %v329, 0
        %v413 = vsel %vm332, %v331, 0
        %415 = vmatprep.subr.mxu0 0.0
        %416 = vmatpush1.xpose.msra.mxu0 %v413
        %417 = vmatprep.subr.mxu0 0.0
        %418 = vmatpush1.xpose.msra.mxu0 0.0
        %419 = vmatprep.subr.mxu0 0.0
        %420 = vmatpush1.xpose.msra.mxu0 0.0
        %421 = vmatprep.subr.mxu0 0.0
        %422 = vmatpush1.xpose.msra.mxu0 0.0
        %423 = vmatprep.subr.mxu0 0.0
        %424 = vmatpush1.xpose.msra.mxu0 0.0
        %425 = vmatprep.subr.mxu0 0.0
        %426 = vmatpush1.xpose.msra.mxu0 0.0
        %427 = vmatprep.subr.mxu0 0.0
        %428 = vmatpush1.xpose.msra.mxu0 0.0
        %429 = vmatprep.subr.mxu0 0.0
        %430 = vmatpush1.xpose.msra.mxu0 0.0
        %431 = vmatprep.subr.mxu0 0.0
        %432 = vmatpush1.xpose.msra.mxu0 0.0
        %433 = vmatprep.subr.mxu0 0.0
        %434 = vmatpush1.xpose.msra.mxu0 0.0
        %435 = vmatprep.subr.mxu0 0.0
        %436 = vmatpush1.xpose.msra.mxu0 0.0
        %437 = vmatprep.subr.mxu0 0.0
        %438 = vmatpush1.xpose.msra.mxu0 0.0
        %439 = vmatprep.subr.mxu0 0.0
        %440 = vmatpush1.xpose.msra.mxu0 0.0
        %441 = vmatprep.subr.mxu0 0.0
        %442 = vmatpush1.xpose.msra.mxu0 0.0
        %443 = vmatprep.subr.mxu0 0.0
        %444 = vmatpush1.xpose.msra.mxu0 0.0
        %445 = vmatprep.subr.mxu0 0.0
        %446 = vmatpush1.xpose.msra.mxu0 0.0
        %447 = vmatprep.subr.mxu0 0.0
        %448 = vmatpush1.xpose.msra.mxu0 0.0
        %449 = vmatprep.subr.mxu0 0.0
        %450 = vmatpush1.xpose.msra.mxu0 0.0
        %451 = vmatprep.subr.mxu0 0.0
        %452 = vmatpush1.xpose.msra.mxu0 0.0
        %453 = vmatprep.subr.mxu0 0.0
        %454 = vmatpush1.xpose.msra.mxu0 0.0
        %455 = vmatprep.subr.mxu0 0.0
        %456 = vmatpush1.xpose.msra.mxu0 0.0
        %457 = vmatprep.subr.mxu0 0.0
        %458 = vmatpush1.xpose.msra.mxu0 0.0
        %459 = vmatprep.subr.mxu0 0.0
        %460 = vmatpush1.xpose.msra.mxu0 0.0
        %461 = vmatprep.subr.mxu0 0.0
        %462 = vmatpush1.xpose.msra.mxu0 0.0
        %463 = vmatprep.subr.mxu0 0.0
        %464 = vmatpush1.xpose.msra.mxu0 0.0
        %465 = vmatprep.subr.mxu0 0.0
        %466 = vmatpush1.xpose.msra.mxu0 0.0
        %467 = vmatprep.subr.mxu0 0.0
        %468 = vmatpush1.xpose.msra.mxu0 0.0
        %469 = vmatprep.subr.mxu0 0.0
        %470 = vmatpush1.xpose.msra.mxu0 0.0
        %471 = vmatprep.subr.mxu0 0.0
        %472 = vmatpush1.xpose.msra.mxu0 0.0
        %473 = vmatprep.subr.mxu0 0.0
        %474 = vmatpush1.xpose.msra.mxu0 0.0
        %475 = vmatprep.subr.mxu0 0.0
        %476 = vmatpush1.xpose.msra.mxu0 0.0
        %477 = vmatprep.subr.mxu0 0.0
        %478 = vmatpush1.xpose.msra.mxu0 0.0
        %479 = vmatprep.mubr.f32.mxu0 0.0
        %480 = vmatmul.mubr.f32.gmra.mrb[0].mxu0 %v410
        %v481 = vpop.f32.mrb[0].mxu0
        %v482 = vadd.f32 0.0, %v481
        %v483 = vpop.f32.mrb[0].mxu0
        %484 = vdwg.mxu0
        %v485 = vmul.f32 %v406, 0.17677669
        %v486 = vmul.f32 %v482, 0.17677669
        %vm487 = vcmask 64512
        %v488 = vsel %vm487, %v485, -inf
        %489 = vmax.xlane.f32.xlu0 %v488
        %v490 = vpop.xlane.xlu0 %489
        %v491 = vsel %vm487, %v486, -inf
        %492 = vmax.xlane.f32.xlu0 %v491
        %v493 = vpop.xlane.xlu0 %492
        %v494 = vsub.f32 %v485, %v490
        %v495 = vsub.f32 %v486, %v493
        %v496 = vmul.f32 %v494, 1.442695
        %v497 = vpow.pop %v496
        %v498 = vmul.f32 %v495, 1.442695
        %v499 = vpow.pop %v498
        %v500 = vsel %vm487, %v497, 0.0
        %501 = vadd.xlane.f32.xlu0 %v500
        %v502 = vpop.xlane.xlu0 %501
        %v503 = vsel %vm487, %v499, 0.0
        %504 = vadd.xlane.f32.xlu0 %v503
        %v505 = vpop.xlane.xlu0 %504
        %v506 = vrcp.pop %v502
        %v507 = vrcp.pop %v505
        %v508 = vmul.f32 %v497, %v506
        %v509 = vmul.f32 %v499, %v507
        %v510 = vld [vmem:[%s283] sm:$0xff]
        %v511 = vld [vmem:[%s283 + $0x8] sm:$0xff]
        %v513 = vsel %vm487, %v508, 0
        %515 = vmatprep.subr.mxu0 0.0
        %516 = vmatpush1.msra.mxu0 %v510
        %517 = vmatprep.subr.mxu0 0.0
        %518 = vmatpush1.msra.mxu0 0.0
        %519 = vmatprep.subr.mxu0 0.0
        %520 = vmatpush1.msra.mxu0 0.0
        %521 = vmatprep.subr.mxu0 0.0
        %522 = vmatpush1.msra.mxu0 0.0
        %523 = vmatprep.subr.mxu0 0.0
        %524 = vmatpush1.msra.mxu0 0.0
        %525 = vmatprep.subr.mxu0 0.0
        %526 = vmatpush1.msra.mxu0 0.0
        %527 = vmatprep.subr.mxu0 0.0
        %528 = vmatpush1.msra.mxu0 0.0
        %529 = vmatprep.subr.mxu0 0.0
        %530 = vmatpush1.msra.mxu0 0.0
        %531 = vmatprep.subr.mxu0 0.0
        %532 = vmatpush1.msra.mxu0 0.0
        %533 = vmatprep.subr.mxu0 0.0
        %534 = vmatpush1.msra.mxu0 0.0
        %535 = vmatprep.subr.mxu0 0.0
        %536 = vmatpush1.msra.mxu0 0.0
        %537 = vmatprep.subr.mxu0 0.0
        %538 = vmatpush1.msra.mxu0 0.0
        %539 = vmatprep.subr.mxu0 0.0
        %540 = vmatpush1.msra.mxu0 0.0
        %541 = vmatprep.subr.mxu0 0.0
        %542 = vmatpush1.msra.mxu0 0.0
        %543 = vmatprep.subr.mxu0 0.0
        %544 = vmatpush1.msra.mxu0 0.0
        %545 = vmatprep.subr.mxu0 0.0
        %546 = vmatpush1.msra.mxu0 0.0
        %547 = vmatprep.subr.mxu0 0.0
        %548 = vmatpush1.msra.mxu0 0.0
        %549 = vmatprep.subr.mxu0 0.0
        %550 = vmatpush1.msra.mxu0 0.0
        %551 = vmatprep.subr.mxu0 0.0
        %552 = vmatpush1.msra.mxu0 0.0
        %553 = vmatprep.subr.mxu0 0.0
        %554 = vmatpush1.msra.mxu0 0.0
        %555 = vmatprep.subr.mxu0 0.0
        %556 = vmatpush1.msra.mxu0 0.0
        %557 = vmatprep.subr.mxu0 0.0
        %558 = vmatpush1.msra.mxu0 0.0
        %559 = vmatprep.subr.mxu0 0.0
        %560 = vmatpush1.msra.mxu0 0.0
        %561 = vmatprep.subr.mxu0 0.0
        %562 = vmatpush1.msra.mxu0 0.0
        %563 = vmatprep.subr.mxu0 0.0
        %564 = vmatpush1.msra.mxu0 0.0
        %565 = vmatprep.subr.mxu0 0.0
        %566 = vmatpush1.msra.mxu0 0.0
        %567 = vmatprep.subr.mxu0 0.0
        %568 = vmatpush1.msra.mxu0 0.0
        %569 = vmatprep.subr.mxu0 0.0
        %570 = vmatpush1.msra.mxu0 0.0
        %571 = vmatprep.subr.mxu0 0.0
        %572 = vmatpush1.msra.mxu0 0.0
        %573 = vmatprep.subr.mxu0 0.0
        %574 = vmatpush1.msra.mxu0 0.0
        %575 = vmatprep.subr.mxu0 0.0
        %576 = vmatpush1.msra.mxu0 0.0
        %577 = vmatprep.subr.mxu0 0.0
        %578 = vmatpush1.msra.mxu0 0.0
        %579 = vmatprep.mubr.f32.mxu0 0.0
        %580 = vmatmul.mubr.f32.gmra.mrb[0].mxu0 %v513
        %v581 = vpop.f32.mrb[0].mxu0
        %v582 = vadd.f32 0.0, %v581
        %v583 = vpop.f32.mrb[0].mxu0
        %584 = vdwg.mxu0
        %v586 = vsel %vm487, %v509, 0
        %588 = vmatprep.subr.mxu0 0.0
        %589 = vmatpush1.msra.mxu0 %v511
        %590 = vmatprep.subr.mxu0 0.0
        %591 = vmatpush1.msra.mxu0 0.0
        %592 = vmatprep.subr.mxu0 0.0
        %593 = vmatpush1.msra.mxu0 0.0
        %594 = vmatprep.subr.mxu0 0.0
        %595 = vmatpush1.msra.mxu0 0.0
        %596 = vmatprep.subr.mxu0 0.0
        %597 = vmatpush1.msra.mxu0 0.0
        %598 = vmatprep.subr.mxu0 0.0
        %599 = vmatpush1.msra.mxu0 0.0
        %600 = vmatprep.subr.mxu0 0.0
        %601 = vmatpush1.msra.mxu0 0.0
        %602 = vmatprep.subr.mxu0 0.0
        %603 = vmatpush1.msra.mxu0 0.0
        %604 = vmatprep.subr.mxu0 0.0
        %605 = vmatpush1.msra.mxu0 0.0
        %606 = vmatprep.subr.mxu0 0.0
        %607 = vmatpush1.msra.mxu0 0.0
        %608 = vmatprep.subr.mxu0 0.0
        %609 = vmatpush1.msra.mxu0 0.0
        %610 = vmatprep.subr.mxu0 0.0
        %611 = vmatpush1.msra.mxu0 0.0
        %612 = vmatprep.subr.mxu0 0.0
        %613 = vmatpush1.msra.mxu0 0.0
        %614 = vmatprep.subr.mxu0 0.0
        %615 = vmatpush1.msra.mxu0 0.0
        %616 = vmatprep.subr.mxu0 0.0
        %617 = vmatpush1.msra.mxu0 0.0
        %618 = vmatprep.subr.mxu0 0.0
        %619 = vmatpush1.msra.mxu0 0.0
        %620 = vmatprep.subr.mxu0 0.0
        %621 = vmatpush1.msra.mxu0 0.0
        %622 = vmatprep.subr.mxu0 0.0
        %623 = vmatpush1.msra.mxu0 0.0
        %624 = vmatprep.subr.mxu0 0.0
        %625 = vmatpush1.msra.mxu0 0.0
        %626 = vmatprep.subr.mxu0 0.0
        %627 = vmatpush1.msra.mxu0 0.0
        %628 = vmatprep.subr.mxu0 0.0
        %629 = vmatpush1.msra.mxu0 0.0
        %630 = vmatprep.subr.mxu0 0.0
        %631 = vmatpush1.msra.mxu0 0.0
        %632 = vmatprep.subr.mxu0 0.0
        %633 = vmatpush1.msra.mxu0 0.0
        %634 = vmatprep.subr.mxu0 0.0
        %635 = vmatpush1.msra.mxu0 0.0
        %636 = vmatprep.subr.mxu0 0.0
        %637 = vmatpush1.msra.mxu0 0.0
        %638 = vmatprep.subr.mxu0 0.0
        %639 = vmatpush1.msra.mxu0 0.0
        %640 = vmatprep.subr.mxu0 0.0
        %641 = vmatpush1.msra.mxu0 0.0
        %642 = vmatprep.subr.mxu0 0.0
        %643 = vmatpush1.msra.mxu0 0.0
        %644 = vmatprep.subr.mxu0 0.0
        %645 = vmatpush1.msra.mxu0 0.0
        %646 = vmatprep.subr.mxu0 0.0
        %647 = vmatpush1.msra.mxu0 0.0
        %648 = vmatprep.subr.mxu0 0.0
        %649 = vmatpush1.msra.mxu0 0.0
        %650 = vmatprep.subr.mxu0 0.0
        %651 = vmatpush1.msra.mxu0 0.0
        %652 = vmatprep.mubr.f32.mxu0 0.0
        %653 = vmatmul.mubr.f32.gmra.mrb[0].mxu0 %v586
        %v654 = vpop.f32.mrb[0].mxu0
        %v655 = vadd.f32 0.0, %v654
        %v656 = vpop.f32.mrb[0].mxu0
        %657 = vdwg.mxu0
        %658 = vst.msk [vmem:[%s315] sm:$0xff] %vm332, %v582
        %659 = vst.msk [vmem:[%s315 + $0x8] sm:$0xff] %vm332, %v655
        %660 = vst.msk [vmem:[%s322] sm:$0xff] %vm487, %v508
        %661 = vst.msk [vmem:[%s322 + $0x8] sm:$0xff] %vm487, %v509
        %s662 = sand.u32 %s130, 1
        %s663 = scalar_lea.sflag [#allocation4], %s662
        %s664 = sand.u32 %s130, 1
        %s665 = smul.addr %s664, 16
        %s666 = scalar_lea.vmem [#allocation8], %s665
        %s667 = sand.u32 %s158, 1
        %s668 = scalar_lea.sflag [#allocation10], %s667
        %s669 = sand.u32 %s158, 1
        %s670 = smul.addr %s669, 16
        %s671 = scalar_lea.vmem [#allocation9], %s670
        // Predicated region
        $region45: #{tpu_custom_call.1} parent=31 // pred_check
          %p672 = pneg %p140
        $region46: #{tpu_custom_call.1} parent=31 // pred_check_branch
          %674 = sbr.rel (%p672) target = $region48
        $region47: #{tpu_custom_call.1} parent=31 // pred_region
          %s675 = smul.u32 2, %s32
          %s677 = ssub.s32 256, 256
          %678 = vsyncadd %s663, %s677
          %s679 = sadd.s32 %s33, %s675
          %s680 = smul.addr %s679, 128
          %s681 = scalar_lea.hbm %s3, %s680
          %s682 = sshll.u32 %s666, 4
          %s683 = int_to_ptr.vmem [resolvable:$true] %s682
          %688 = dma.vmem_to_hbm [thread:$0]  %s683, 256, %s681, %s663, 128, 128, 8
        $region48: #{tpu_custom_call.1} parent=31 // pred_fallthru
          _
        // Predicated region
        $region49: #{tpu_custom_call.1} parent=31 // pred_check
          %p689 = pneg %p168
        $region50: #{tpu_custom_call.1} parent=31 // pred_check_branch
          %691 = sbr.rel (%p689) target = $region52
        $region51: #{tpu_custom_call.1} parent=31 // pred_region
          %s692 = smul.u32 2, %s32
          %s694 = ssub.s32 256, 256
          %695 = vsyncadd %s668, %s694
          %s696 = sadd.s32 %s33, %s692
          %s697 = smul.addr %s696, 128
          %s698 = scalar_lea.hbm %s4, %s697
          %s699 = sshll.u32 %s671, 4
          %s700 = int_to_ptr.vmem [resolvable:$true] %s699
          %705 = dma.vmem_to_hbm [thread:$0]  %s700, 256, %s698, %s668, 128, 128, 8
        $region52: #{tpu_custom_call.1} parent=31 // pred_fallthru
          _
      $region32: #{tpu_custom_call.1} parent=5 // pred_fallthru
        _
      %p706 = scmp.le.s32.totalorder 2, %s23
      // Predicated region
      $region53: #{tpu_custom_call.1} parent=5 // pred_check
        %p707 = pneg %p706
      $region54: #{tpu_custom_call.1} parent=5 // pred_check_branch
        %709 = sbr.rel (%p707) target = $region56
      $region55: #{tpu_custom_call.1} parent=5 // pred_region
        %s710 = ssub.s32 %s23, 2
        // Predicated region
        $region57: #{tpu_custom_call.1} parent=55 // pred_check
          %p711 = pneg %p146
        $region58: #{tpu_custom_call.1} parent=55 // pred_check_branch
          %713 = sbr.rel (%p711) target = $region60
        $region59: #{tpu_custom_call.1} parent=55 // pred_region
          %s714 = sand.u32 %s131, 1
          %s715 = scalar_lea.sflag [#allocation4], %s714
          %s716 = sand.u32 %s131, 1
          %s717 = smul.addr %s716, 16
          %s718 = scalar_lea.vmem [#allocation8], %s717
          %719 = dma.done %s715, 256
        $region60: #{tpu_custom_call.1} parent=55 // pred_fallthru
          _
        // Predicated region
        $region61: #{tpu_custom_call.1} parent=55 // pred_check
          %p720 = pneg %p174
        $region62: #{tpu_custom_call.1} parent=55 // pred_check_branch
          %722 = sbr.rel (%p720) target = $region64
        $region63: #{tpu_custom_call.1} parent=55 // pred_region
          %s723 = sand.u32 %s159, 1
          %s724 = scalar_lea.sflag [#allocation10], %s723
          %s725 = sand.u32 %s159, 1
          %s726 = smul.addr %s725, 16
          %s727 = scalar_lea.vmem [#allocation9], %s726
          %728 = dma.done %s724, 256
        $region64: #{tpu_custom_call.1} parent=55 // pred_fallthru
          _
      $region56: #{tpu_custom_call.1} parent=5 // pred_fallthru
        _
    $region6: #{tpu_custom_call.1} parent=1 // loop_footer
      %s27 = sadd.s32 1, %s23
    $region7: #{tpu_custom_call.1} parent=1 // loop_footer_branch
      %22 = sbr.rel target = $region3
    $region8: #{tpu_custom_call.1} parent=1 // loop_exit
      _
    %729 = vsyncpa [#allocation3], 1
    %s730 = scalar_lea.sflag [#allocation3], 1
    %731 = vsyncpa %s730, 1
    %732 = vsyncpa [#allocation6], 1
    %s733 = scalar_lea.sflag [#allocation6], 1
    %734 = vsyncpa %s733, 1
    %735 = vsyncpa [#allocation4], 1
    %s736 = scalar_lea.sflag [#allocation4], 1
    %737 = vsyncpa %s736, 1
    %738 = vsyncpa [#allocation10], 1
    %s739 = scalar_lea.sflag [#allocation10], 1
    %740 = vsyncpa %s739, 1

</llo_original>
